<compile_context>
chip_gen: v7x
topology: tpu7x:2x2x1
jax: 0.10.0
libtpu: 0.0.40
codegen_flags: <defaults>
</compile_context>

<pallas_src>
import jax
import jax.numpy as jnp
from jax.experimental import pallas as pl
from jax.experimental.pallas import tpu as pltpu

_LANES = 1024                          # lane-dense slab width (multiple of 128)
_BLOCK_ROWS = 512                      # 512*1024*4B = 2 MiB per f32 tile
_FULL_BLOCK_BYTES = 2 * 1024 * 1024    # per-tensor "whole array in VMEM" cutoff
_FUSED_TOTAL_BYTES = 4 * 1024 * 1024   # all-four-in-one-call cutoff


def _nbytes(t):
    return int(t.size) * t.dtype.itemsize


# ---------------------------------------------------------------------------
# Kernels
# ---------------------------------------------------------------------------

def _relu1_kernel(x_ref, o_ref):
    # AlphaDropout in eval mode is the identity, so the fused op is just ReLU.
    o_ref[...] = jnp.maximum(x_ref[...], 0)


def _relu4_kernel(x_ref, y_ref, z_ref, w_ref, ox_ref, oy_ref, oz_ref, ow_ref):
    ox_ref[...] = jnp.maximum(x_ref[...], 0)
    oy_ref[...] = jnp.maximum(y_ref[...], 0)
    oz_ref[...] = jnp.maximum(z_ref[...], 0)
    ow_ref[...] = jnp.maximum(w_ref[...], 0)


# ---------------------------------------------------------------------------
# Wrappers / dispatch
# ---------------------------------------------------------------------------

_VMEM_SPEC = pl.BlockSpec(memory_space=pltpu.MemorySpace.VMEM)


def _relu4_fused(x, y, z, w):
    """All four tensors in ONE pallas_call: full-array VMEM refs, no grid."""
    tensors = (x, y, z, w)
    out_shape = tuple(jax.ShapeDtypeStruct(t.shape, t.dtype) for t in tensors)
    return pl.pallas_call(
        _relu4_kernel,
        out_shape=out_shape,
        in_specs=[_VMEM_SPEC] * 4,
        out_specs=(_VMEM_SPEC,) * 4,
    )(*tensors)


def _relu_full(t):
    """One tensor, full-array VMEM ref, no grid (tensor <= 2 MiB)."""
    return pl.pallas_call(
        _relu1_kernel,
        out_shape=jax.ShapeDtypeStruct(t.shape, t.dtype),
        in_specs=[_VMEM_SPEC],
        out_specs=_VMEM_SPEC,
    )(t)


def _relu_stream(t):
    """Large tensor: lane-dense (rows, 1024) slab streamed in 512-row blocks.

    Only minimal padding (to the next multiple of 1024 elements); the last
    row-block is clipped by the grid and masked by Pallas.
    """
    n = int(t.size)
    flat = t.reshape(-1)
    pad = (-n) % _LANES
    if pad:
        flat = jnp.pad(flat, (0, pad))           # <= 1023 padded elements
    rows = flat.shape[0] // _LANES
    slab = flat.reshape(rows, _LANES)

    block_rows = min(_BLOCK_ROWS, rows)
    grid = (pl.cdiv(rows, block_rows),)          # >= 2 steps for >2 MiB tensors

    out = pl.pallas_call(
        _relu1_kernel,
        out_shape=jax.ShapeDtypeStruct(slab.shape, slab.dtype),
        grid=grid,
        in_specs=[pl.BlockSpec((block_rows, _LANES), lambda i: (i, 0))],
        out_specs=pl.BlockSpec((block_rows, _LANES), lambda i: (i, 0)),
        compiler_params=pltpu.CompilerParams(
            dimension_semantics=("parallel",),
        ),
    )(slab)

    out_flat = out.reshape(-1)
    if pad:
        out_flat = out_flat[:n]
    return out_flat.reshape(t.shape)


def _relu_any(t):
    if t.size == 0:
        return t
    if _nbytes(t) <= _FULL_BLOCK_BYTES:
        return _relu_full(t)
    return _relu_stream(t)


def _forward(x, y, z, w):
    """AlphaDropout (eval mode == identity) on each input, then elementwise ReLU."""
    tensors = (x, y, z, w)
    if (all(t.size > 0 for t in tensors)
            and sum(_nbytes(t) for t in tensors) <= _FUSED_TOTAL_BYTES):
        # Tiny/medium case: one kernel launch, zero wrapper copies.
        return _relu4_fused(*tensors)
    # Large case: handle each tensor independently (bandwidth-bound; launch
    # overhead is negligible at these sizes).
    return tuple(_relu_any(t) for t in tensors)


_forward_jit = jax.jit(_forward)


class Model:
    """JAX/Pallas port of the PyTorch Model (two AlphaDropout layers + ReLU).

    nn.AlphaDropout() / nn.AlphaDropout(p=0.7) have no parameters and are
    identity ops in eval/inference mode, so the only compute is elementwise
    ReLU on each of the four inputs.
    """

    def __call__(self, x, y, z, w):
        # TODO(synk): training-mode AlphaDropout (SELU-preserving stochastic
        # noise) is not modeled; the pnnx/ncnn export runs the module in eval.
        return _forward_jit(x, y, z, w)


if __name__ == "__main__":
    key = jax.random.PRNGKey(0)
    k0, k1, k2, k3 = jax.random.split(key, 4)

    # Small shapes of varying rank, consistent with the 4-input forward.
    x = jax.random.normal(k0, (2, 16), dtype=jnp.float32)
    y = jax.random.normal(k1, (2, 4, 16), dtype=jnp.float32)
    z = jax.random.normal(k2, (2, 4, 16, 16), dtype=jnp.float32)
    w = jax.random.normal(k3, (2, 32), dtype=jnp.float32)

    model = Model()
    outs = model(x, y, z, w)
    outs = jax.block_until_ready(outs)

    # Sanity check against pure-JAX reference (identity dropout + relu).
    refs = tuple(jnp.maximum(t, 0.0) for t in (x, y, z, w))
    for o, r in zip(outs, refs):
        assert o.shape == r.shape and o.dtype == r.dtype
        assert bool(jnp.allclose(o, r)), "mismatch vs reference"

    print("KERNEL_OK")
</pallas_src>

<mosaic_0001>
module attributes {stable_mosaic.version = 11 : i64} {
  func.func @_relu4_kernel(%arg0: memref<2x16xf32, #tpu.memory_space<vmem>>, %arg1: memref<2x4x16xf32, #tpu.memory_space<vmem>>, %arg2: memref<2x4x16x16xf32, #tpu.memory_space<vmem>>, %arg3: memref<2x32xf32, #tpu.memory_space<vmem>>, %arg4: memref<2x16xf32, #tpu.memory_space<vmem>>, %arg5: memref<2x4x16xf32, #tpu.memory_space<vmem>>, %arg6: memref<2x4x16x16xf32, #tpu.memory_space<vmem>>, %arg7: memref<2x32xf32, #tpu.memory_space<vmem>>) attributes {dimension_semantics = [], scalar_prefetch = 0 : i64, scratch_operands = 0 : i64, tpu.core_type = #tpu.core_type<tc>} {
    %c0 = arith.constant 0 : index
    %c0_0 = arith.constant 0 : index
    %0 = vector.load %arg0[%c0, %c0_0] : memref<2x16xf32, #tpu.memory_space<vmem>>, vector<2x16xf32>
    %cst = arith.constant 0.000000e+00 : f32
    %1 = vector.broadcast %cst : f32 to vector<2x16xf32>
    %2 = arith.maximumf %0, %1 : vector<2x16xf32>
    %c0_1 = arith.constant 0 : index
    %c0_2 = arith.constant 0 : index
    %3 = vector.load %arg4[%c0_1, %c0_2] : memref<2x16xf32, #tpu.memory_space<vmem>>, vector<2x16xf32>
    tpu.vector_store %arg4[%c0_1, %c0_2], %2 {strides = array<i32>} : memref<2x16xf32, #tpu.memory_space<vmem>>, vector<2x16xf32>,
    %c0_3 = arith.constant 0 : index
    %c0_4 = arith.constant 0 : index
    %c0_5 = arith.constant 0 : index
    %4 = vector.load %arg1[%c0_3, %c0_4, %c0_5] : memref<2x4x16xf32, #tpu.memory_space<vmem>>, vector<2x4x16xf32>
    %cst_6 = arith.constant 0.000000e+00 : f32
    %5 = vector.broadcast %cst_6 : f32 to vector<2x4x16xf32>
    %6 = arith.maximumf %4, %5 : vector<2x4x16xf32>
    %c0_7 = arith.constant 0 : index
    %c0_8 = arith.constant 0 : index
    %c0_9 = arith.constant 0 : index
    %7 = vector.load %arg5[%c0_7, %c0_8, %c0_9] : memref<2x4x16xf32, #tpu.memory_space<vmem>>, vector<2x4x16xf32>
    tpu.vector_store %arg5[%c0_7, %c0_8, %c0_9], %6 {strides = array<i32>} : memref<2x4x16xf32, #tpu.memory_space<vmem>>, vector<2x4x16xf32>,
    %c0_10 = arith.constant 0 : index
    %c0_11 = arith.constant 0 : index
    %c0_12 = arith.constant 0 : index
    %c0_13 = arith.constant 0 : index
    %8 = vector.load %arg2[%c0_10, %c0_11, %c0_12, %c0_13] : memref<2x4x16x16xf32, #tpu.memory_space<vmem>>, vector<2x4x16x16xf32>
    %cst_14 = arith.constant 0.000000e+00 : f32
    %9 = vector.broadcast %cst_14 : f32 to vector<2x4x16x16xf32>
    %10 = arith.maximumf %8, %9 : vector<2x4x16x16xf32>
    %c0_15 = arith.constant 0 : index
    %c0_16 = arith.constant 0 : index
    %c0_17 = arith.constant 0 : index
    %c0_18 = arith.constant 0 : index
    %11 = vector.load %arg6[%c0_15, %c0_16, %c0_17, %c0_18] : memref<2x4x16x16xf32, #tpu.memory_space<vmem>>, vector<2x4x16x16xf32>
    tpu.vector_store %arg6[%c0_15, %c0_16, %c0_17, %c0_18], %10 {strides = array<i32>} : memref<2x4x16x16xf32, #tpu.memory_space<vmem>>, vector<2x4x16x16xf32>,
    %c0_19 = arith.constant 0 : index
    %c0_20 = arith.constant 0 : index
    %12 = vector.load %arg3[%c0_19, %c0_20] : memref<2x32xf32, #tpu.memory_space<vmem>>, vector<2x32xf32>
    %cst_21 = arith.constant 0.000000e+00 : f32
    %13 = vector.broadcast %cst_21 : f32 to vector<2x32xf32>
    %14 = arith.maximumf %12, %13 : vector<2x32xf32>
    %c0_22 = arith.constant 0 : index
    %c0_23 = arith.constant 0 : index
    %15 = vector.load %arg7[%c0_22, %c0_23] : memref<2x32xf32, #tpu.memory_space<vmem>>, vector<2x32xf32>
    tpu.vector_store %arg7[%c0_22, %c0_23], %14 {strides = array<i32>} : memref<2x32xf32, #tpu.memory_space<vmem>>, vector<2x32xf32>,
    return
  }
}

</mosaic_0001>

<llo_original>
// kernel: _forward.1
$region0: #{_forward.1}
  #allocation0 [shape = 'u32[]', space=smem, size = 0x4, offset = 0x4, fixed_abs, tag = 'smem constant byte address 0x4 - core index']
  #allocation1 [shape = 'u32[144,128]{1,0:T(1,128)}', space=vmem, size = 0x12000, scoped, tag = 'internal scratch']
  %s0 = inlined_call_operand.hbm [shape: f32[2,16], index: 0, kind: input, shape index: {}]
  %s1 = inlined_call_operand.hbm [shape: f32[2,4,16], index: 1, kind: input, shape index: {}]
  %s2 = inlined_call_operand.hbm [shape: f32[2,4,16,16], index: 2, kind: input, shape index: {}]
  %s3 = inlined_call_operand.vmem [shape: f32[2,32], index: 3, kind: input, shape index: {}]
  %s4 = inlined_call_operand.hbm [shape: f32[2,16], index: 4, kind: output, shape index: {0}]
  %s5 = inlined_call_operand.hbm [shape: f32[2,4,16], index: 5, kind: output, shape index: {1}]
  %s6 = inlined_call_operand.hbm [shape: f32[2,4,16,16], index: 6, kind: output, shape index: {2}]
  %s7 = inlined_call_operand.hbm [shape: f32[2,32], index: 7, kind: output, shape index: {3}]
  %8 = xla_tuple %s4, %s5, %s6, %s7
  %s9 = sld [smem:[#allocation0]]
  $region62: #{_forward.1} parent=0
    _
  %s11 = ssub.s32 1, %s9
  %s12 = scalar_select 0, %s11, %s9
  $region1: #{_forward.1} parent=0
    #allocation2 [shape = 'u8[1024]{0}', space=vmem, size = 0x400, scoped, tag = 'input window, operand 0, single buffered']
    #allocation3 [shape = 's32[1]{0}', space=sflag, size = 0x4, scoped, tag = 'scoped memory for _forward.1']
    #allocation4 [shape = 's32[1]{0}', space=sflag, size = 0x4, scoped, tag = 'scoped memory for _forward.1']
    #allocation5 [shape = 'u8[4096]{0}', space=vmem, size = 0x1000, scoped, tag = 'input window, operand 1, single buffered']
    #allocation6 [shape = 's32[1]{0}', space=sflag, size = 0x4, scoped, tag = 'scoped memory for _forward.1']
    #allocation7 [shape = 'u8[65536]{0}', space=vmem, size = 0x10000, scoped, tag = 'input window, operand 2, single buffered']
    #allocation8 [shape = 'u8[1024]{0}', space=vmem, size = 0x400, scoped, tag = 'output window, operand 0, single buffered']
    #allocation9 [shape = 'u8[4096]{0}', space=vmem, size = 0x1000, scoped, tag = 'output window, operand 1, single buffered']
    #allocation10 [shape = 's32[1]{0}', space=sflag, size = 0x4, scoped, tag = 'scoped memory for _forward.1']
    #allocation11 [shape = 'u8[65536]{0}', space=vmem, size = 0x10000, scoped, tag = 'output window, operand 2, single buffered']
    #allocation12 [shape = 'u8[1024]{0}', space=vmem, size = 0x400, scoped, tag = 'output window, operand 3, single buffered']
    #allocation13 [shape = 's32[1]{0}', space=sflag, size = 0x4, scoped, tag = 'scoped memory for _forward.1']
    %13 = vsyncpa [#allocation3], 0
    %14 = vsyncpa [#allocation6], 0
    %15 = vsyncpa [#allocation4], 0
    %16 = vsyncpa [#allocation10], 0
    %17 = vsyncpa [#allocation13], 0
    // Predicated region
    $region2: #{_forward.1} parent=1 // pred_check
      _
    $region3: #{_forward.1} parent=1 // pred_check_branch
      %19 = sbr.rel (0) target = $region5
    $region4: #{_forward.1} parent=1 // pred_region
      %s21 = ssub.s32 32, 32
      %22 = vsyncadd [#allocation3], %s21
      %s24 = sshll.u32 [#allocation2], 4
      %s25 = int_to_ptr.vmem [resolvable:$true] %s24
      %27 = dma.hbm_to_vmem [thread:$0]  %s0, 32, %s25, [#allocation3]
    $region5: #{_forward.1} parent=1 // pred_fallthru
      _
    // Predicated region
    $region6: #{_forward.1} parent=1 // pred_check
      _
    $region7: #{_forward.1} parent=1 // pred_check_branch
      %29 = sbr.rel (0) target = $region9
    $region8: #{_forward.1} parent=1 // pred_region
      %s31 = ssub.s32 128, 128
      %32 = vsyncadd [#allocation6], %s31
      %s33 = sshll.u32 [#allocation5], 4
      %s34 = int_to_ptr.vmem [resolvable:$true] %s33
      %39 = dma.hbm_to_vmem [thread:$0]  %s1, 128, %s34, [#allocation6], 64, 64, 4
    $region9: #{_forward.1} parent=1 // pred_fallthru
      _
    // Predicated region
    $region10: #{_forward.1} parent=1 // pred_check
      _
    $region11: #{_forward.1} parent=1 // pred_check_branch
      %41 = sbr.rel (0) target = $region13
    $region12: #{_forward.1} parent=1 // pred_region
      %s43 = ssub.s32 2048, 2048
      %44 = vsyncadd [#allocation6], %s43
      %s45 = sshll.u32 [#allocation7], 4
      %s46 = int_to_ptr.vmem [resolvable:$true] %s45
      %51 = dma.hbm_to_vmem [thread:$0]  %s2, 2048, %s46, [#allocation6], 128, 128, 8
    $region13: #{_forward.1} parent=1 // pred_fallthru
      _
    // Predicated region
    $region14: #{_forward.1} parent=1 // pred_check
      _
    $region15: #{_forward.1} parent=1 // pred_check_branch
      %53 = sbr.rel (0) target = $region17
    $region16: #{_forward.1} parent=1 // pred_region
      _
    $region17: #{_forward.1} parent=1 // pred_fallthru
      _
    // Predicated region
    $region18: #{_forward.1} parent=1 // pred_check
      _
    $region19: #{_forward.1} parent=1 // pred_check_branch
      %55 = sbr.rel (0) target = $region21
    $region20: #{_forward.1} parent=1 // pred_region
      %56 = dma.done [#allocation3], 32
    $region21: #{_forward.1} parent=1 // pred_fallthru
      _
    // Predicated region
    $region22: #{_forward.1} parent=1 // pred_check
      _
    $region23: #{_forward.1} parent=1 // pred_check_branch
      %58 = sbr.rel (0) target = $region25
    $region24: #{_forward.1} parent=1 // pred_region
      %59 = dma.done [#allocation6], 128
    $region25: #{_forward.1} parent=1 // pred_fallthru
      _
    // Predicated region
    $region26: #{_forward.1} parent=1 // pred_check
      _
    $region27: #{_forward.1} parent=1 // pred_check_branch
      %61 = sbr.rel (0) target = $region29
    $region28: #{_forward.1} parent=1 // pred_region
      %62 = dma.done [#allocation6], 2048
    $region29: #{_forward.1} parent=1 // pred_fallthru
      _
    %v63 = vld [vmem:[#allocation2] sm:$0x3]
    %v64 = vmax.f32 %v63, 0.0
    %vm65 = vcmask 123904
    %66 = vst.msk [vmem:[#allocation8] sm:$0x3] %vm65, %v64
    %v67 = vld [vmem:[#allocation5] sm:$0xf]
    %v68 = vld [vmem:[#allocation5 + $0x4] sm:$0xf]
    %v69 = vmax.f32 %v67, 0.0
    %v70 = vmax.f32 %v68, 0.0
    %vm71 = vcmask 125952
    %72 = vst.msk [vmem:[#allocation9] sm:$0xf] %vm71, %v69
    %73 = vst.msk [vmem:[#allocation9 + $0x4] sm:$0xf] %vm71, %v70
    %v74 = vld [vmem:[#allocation7] sm:$0xff]
    %v75 = vld [vmem:[#allocation7 + $0x8] sm:$0xff]
    %v76 = vld [vmem:[#allocation7 + $0x10] sm:$0xff]
    %v77 = vld [vmem:[#allocation7 + $0x18] sm:$0xff]
    %v78 = vld [vmem:[#allocation7 + $0x20] sm:$0xff]
    %v79 = vld [vmem:[#allocation7 + $0x28] sm:$0xff]
    %v80 = vld [vmem:[#allocation7 + $0x30] sm:$0xff]
    %v81 = vld [vmem:[#allocation7 + $0x38] sm:$0xff]
    %v82 = vld [vmem:[#allocation7 + $0x40] sm:$0xff]
    %v83 = vld [vmem:[#allocation7 + $0x48] sm:$0xff]
    %v84 = vld [vmem:[#allocation7 + $0x50] sm:$0xff]
    %v85 = vld [vmem:[#allocation7 + $0x58] sm:$0xff]
    %v86 = vld [vmem:[#allocation7 + $0x60] sm:$0xff]
    %v87 = vld [vmem:[#allocation7 + $0x68] sm:$0xff]
    %v88 = vld [vmem:[#allocation7 + $0x70] sm:$0xff]
    %v89 = vld [vmem:[#allocation7 + $0x78] sm:$0xff]
    %v90 = vmax.f32 %v74, 0.0
    %v91 = vmax.f32 %v75, 0.0
    %v92 = vmax.f32 %v76, 0.0
    %v93 = vmax.f32 %v77, 0.0
    %v94 = vmax.f32 %v78, 0.0
    %v95 = vmax.f32 %v79, 0.0
    %v96 = vmax.f32 %v80, 0.0
    %v97 = vmax.f32 %v81, 0.0
    %v98 = vmax.f32 %v82, 0.0
    %v99 = vmax.f32 %v83, 0.0
    %v100 = vmax.f32 %v84, 0.0
    %v101 = vmax.f32 %v85, 0.0
    %v102 = vmax.f32 %v86, 0.0
    %v103 = vmax.f32 %v87, 0.0
    %v104 = vmax.f32 %v88, 0.0
    %v105 = vmax.f32 %v89, 0.0
    %vm106 = vcmask 130048
    %107 = vst.msk [vmem:[#allocation11] sm:$0xff] %vm106, %v90
    %108 = vst.msk [vmem:[#allocation11 + $0x8] sm:$0xff] %vm106, %v91
    %109 = vst.msk [vmem:[#allocation11 + $0x10] sm:$0xff] %vm106, %v92
    %110 = vst.msk [vmem:[#allocation11 + $0x18] sm:$0xff] %vm106, %v93
    %111 = vst.msk [vmem:[#allocation11 + $0x20] sm:$0xff] %vm106, %v94
    %112 = vst.msk [vmem:[#allocation11 + $0x28] sm:$0xff] %vm106, %v95
    %113 = vst.msk [vmem:[#allocation11 + $0x30] sm:$0xff] %vm106, %v96
    %114 = vst.msk [vmem:[#allocation11 + $0x38] sm:$0xff] %vm106, %v97
    %115 = vst.msk [vmem:[#allocation11 + $0x40] sm:$0xff] %vm106, %v98
    %116 = vst.msk [vmem:[#allocation11 + $0x48] sm:$0xff] %vm106, %v99
    %117 = vst.msk [vmem:[#allocation11 + $0x50] sm:$0xff] %vm106, %v100
    %118 = vst.msk [vmem:[#allocation11 + $0x58] sm:$0xff] %vm106, %v101
    %119 = vst.msk [vmem:[#allocation11 + $0x60] sm:$0xff] %vm106, %v102
    %120 = vst.msk [vmem:[#allocation11 + $0x68] sm:$0xff] %vm106, %v103
    %121 = vst.msk [vmem:[#allocation11 + $0x70] sm:$0xff] %vm106, %v104
    %122 = vst.msk [vmem:[#allocation11 + $0x78] sm:$0xff] %vm106, %v105
    %v123 = vld [vmem:[%s3] sm:$0x3]
    %v124 = vmax.f32 %v123, 0.0
    %vm125 = vcmask 254976
    %126 = vst.msk [vmem:[#allocation12] sm:$0x3] %vm125, %v124
    // Predicated region
    $region30: #{_forward.1} parent=1 // pred_check
      _
    $region31: #{_forward.1} parent=1 // pred_check_branch
      %128 = sbr.rel (0) target = $region33
    $region32: #{_forward.1} parent=1 // pred_region
      %s130 = ssub.s32 32, 32
      %131 = vsyncadd [#allocation4], %s130
      %s133 = sshll.u32 [#allocation8], 4
      %s134 = int_to_ptr.vmem [resolvable:$true] %s133
      %136 = dma.vmem_to_hbm [thread:$0]  %s134, 32, %s4, [#allocation4]
    $region33: #{_forward.1} parent=1 // pred_fallthru
      _
    // Predicated region
    $region34: #{_forward.1} parent=1 // pred_check
      _
    $region35: #{_forward.1} parent=1 // pred_check_branch
      %138 = sbr.rel (0) target = $region37
    $region36: #{_forward.1} parent=1 // pred_region
      %s140 = ssub.s32 128, 128
      %141 = vsyncadd [#allocation10], %s140
      %s142 = sshll.u32 [#allocation9], 4
      %s143 = int_to_ptr.vmem [resolvable:$true] %s142
      %148 = dma.vmem_to_hbm [thread:$0]  %s143, 128, %s5, [#allocation10], 64, 64, 4
    $region37: #{_forward.1} parent=1 // pred_fallthru
      _
    // Predicated region
    $region38: #{_forward.1} parent=1 // pred_check
      _
    $region39: #{_forward.1} parent=1 // pred_check_branch
      %150 = sbr.rel (0) target = $region41
    $region40: #{_forward.1} parent=1 // pred_region
      %s152 = ssub.s32 2048, 2048
      %153 = vsyncadd [#allocation10], %s152
      %s154 = sshll.u32 [#allocation11], 4
      %s155 = int_to_ptr.vmem [resolvable:$true] %s154
      %160 = dma.vmem_to_hbm [thread:$0]  %s155, 2048, %s6, [#allocation10], 128, 128, 8
    $region41: #{_forward.1} parent=1 // pred_fallthru
      _
    // Predicated region
    $region42: #{_forward.1} parent=1 // pred_check
      _
    $region43: #{_forward.1} parent=1 // pred_check_branch
      %162 = sbr.rel (0) target = $region45
    $region44: #{_forward.1} parent=1 // pred_region
      %s164 = ssub.s32 32, 32
      %165 = vsyncadd [#allocation13], %s164
      %s167 = sshll.u32 [#allocation12], 4
      %s168 = int_to_ptr.vmem [resolvable:$true] %s167
      %170 = dma.vmem_to_hbm [thread:$0]  %s168, 32, %s7, [#allocation13]
    $region45: #{_forward.1} parent=1 // pred_fallthru
      _
    // Predicated region
    $region46: #{_forward.1} parent=1 // pred_check
      _
    $region47: #{_forward.1} parent=1 // pred_check_branch
      %172 = sbr.rel (0) target = $region49
    $region48: #{_forward.1} parent=1 // pred_region
      %173 = dma.done [#allocation4], 32
    $region49: #{_forward.1} parent=1 // pred_fallthru
      _
    // Predicated region
    $region50: #{_forward.1} parent=1 // pred_check
      _
    $region51: #{_forward.1} parent=1 // pred_check_branch
      %175 = sbr.rel (0) target = $region53
    $region52: #{_forward.1} parent=1 // pred_region
      %176 = dma.done [#allocation10], 128
    $region53: #{_forward.1} parent=1 // pred_fallthru
      _
    // Predicated region
    $region54: #{_forward.1} parent=1 // pred_check
      _
    $region55: #{_forward.1} parent=1 // pred_check_branch
      %178 = sbr.rel (0) target = $region57
    $region56: #{_forward.1} parent=1 // pred_region
      %179 = dma.done [#allocation10], 2048
    $region57: #{_forward.1} parent=1 // pred_fallthru
      _
    // Predicated region
    $region58: #{_forward.1} parent=1 // pred_check
      _
    $region59: #{_forward.1} parent=1 // pred_check_branch
      %181 = sbr.rel (0) target = $region61
    $region60: #{_forward.1} parent=1 // pred_region
      %182 = dma.done [#allocation13], 32
    $region61: #{_forward.1} parent=1 // pred_fallthru
      _
    %183 = vsyncpa [#allocation3], 1
    %184 = vsyncpa [#allocation6], 1
    %185 = vsyncpa [#allocation4], 1
    %186 = vsyncpa [#allocation10], 1
    %187 = vsyncpa [#allocation13], 1

</llo_original>
